<compile_context>
chip_gen: v6e
topology: v6e:2x2x1
jax: 0.10.0
libtpu: 0.0.40
codegen_flags: <defaults>
</compile_context>

<pallas_src>
import jax
import jax.numpy as jnp
from jax.experimental import pallas as pl
from jax.experimental.pallas import tpu as pltpu

_LANE = 128


def t_linear_kernel(x_ref, w_ref, b_ref, o_ref):
    # x_ref: (tm, S), w_ref: (S, P), b_ref: (1, P), o_ref: (tm, P)
    acc = jnp.dot(x_ref[...], w_ref[...],
                  preferred_element_type=jnp.float32)      # MXU, f32 accumulate
    o_ref[...] = (acc + b_ref[...]).astype(o_ref.dtype)    # bias add in f32, cast once


def _round_up(x, m):
    return -(-x // m) * m


def _sublane(itemsize):
    # minimal sublane tile: f32 -> 8, bf16 -> 16, int8/fp8 -> 32
    return 8 * (4 // itemsize) if itemsize in (1, 2, 4) else 8


def _padded_block_bytes(rows, cols, itemsize):
    return _round_up(rows, _sublane(itemsize)) * _round_up(cols, _LANE) * itemsize


def _plan_tiles(M, S, P, itemsize):
    """Pick the row-tile (tm), vmem_limit_bytes, per-generation."""
    kind = ""
    try:
        kind = jax.devices()[0].device_kind.lower()
    except Exception:
        pass

    if "v7" in kind or "7x" in kind:
        # 64 MiB physical / 32 MiB default scoped: tighter budget, deeper grid
        budget, vmem_limit, target_steps = 24 << 20, 32 << 20, 8
    elif "v6" in kind:
        budget, vmem_limit, target_steps = 48 << 20, 64 << 20, 4
    elif "v5" in kind and ("lite" in kind or "5e" in kind):
        budget, vmem_limit, target_steps = 48 << 20, 64 << 20, 4
    else:
        # unknown / older generation: stay safely inside any default
        budget, vmem_limit, target_steps = 24 << 20, 32 << 20, 4

    sub = _sublane(itemsize)

    # Grid-invariant blocks (weight + bias): accounted as double-buffered so
    # the budget is honest even without pipeline_mode tweaks.
    fixed = 2 * (_padded_block_bytes(S, P, itemsize) + _padded_block_bytes(1, P, 4))

    # Per padded row of the (tm, S) input and (tm, P) output blocks, each
    # double-buffered by the pipeline.
    per_row = 2 * itemsize * (_round_up(S, _LANE) + _round_up(P, _LANE))
    avail = max(budget - fixed, per_row * sub)

    tm = max(sub, (avail // per_row) // sub * sub)          # VMEM-limited tile
    cap = _round_up(pl.cdiv(M, target_steps), sub)          # keep the grid deep
    tm = min(tm, cap, _round_up(M, sub))
    if tm >= 512:
        tm = (tm // 256) * 256                              # MXU-friendly granularity
    if M <= sub:
        tm = M                                              # full-dim tiny block
    return tm, vmem_limit


def t_linear_forward(x_enc, weight, bias):
    """x_enc: (B, seq_len, C); weight: (pred_len, seq_len); bias: (pred_len,)."""
    B, S, C = x_enc.shape
    P, S_w = weight.shape
    assert S_w == S

    # The module's own permute(0,2,1): present a lane-dense (M, S) slab to the
    # kernel, where M = B*C independent rows.
    x2 = jnp.transpose(x_enc, (0, 2, 1)).reshape(B * C, S)
    wt = weight.T                                           # (S, P), tiny one-time cost
    b2 = bias.reshape(1, P).astype(jnp.float32)             # broadcast along lanes (P)

    M = B * C
    tm, vmem_limit = _plan_tiles(M, S, P, x_enc.dtype.itemsize)

    out2 = pl.pallas_call(
        t_linear_kernel,
        out_shape=jax.ShapeDtypeStruct((M, P), x_enc.dtype),
        grid_spec=pltpu.PrefetchScalarGridSpec(
            num_scalar_prefetch=0,
            grid=(pl.cdiv(M, tm),),                         # ragged tail handled by masking
            in_specs=[
                pl.BlockSpec((tm, S), lambda i: (i, 0)),    # activations (lane-dense in S)
                pl.BlockSpec((S, P), lambda i: (0, 0)),     # weight (grid-invariant)
                pl.BlockSpec((1, P), lambda i: (0, 0)),     # bias   (grid-invariant)
            ],
            out_specs=pl.BlockSpec((tm, P), lambda i: (i, 0)),  # lane-dense in P
        ),
        compiler_params=pltpu.CompilerParams(
            dimension_semantics=("parallel",),
            vmem_limit_bytes=vmem_limit,
        ),
    )(x2, wt, b2)

    # The module's second permute(0,2,1): (B, C, P) -> (B, P, C).
    return jnp.transpose(out2.reshape(B, C, P), (0, 2, 1))


if __name__ == "__main__":
    # Small config consistent with the module: seq_len=8, pred_len=12, batch=2, channels=4
    B, SEQ_LEN, PRED_LEN, C = 2, 8, 12, 4

    key = jax.random.PRNGKey(0)
    kx, kw, kb = jax.random.split(key, 3)

    # Deterministic parameter init (matches nn.Linear's U(-k, k), k = 1/sqrt(seq_len))
    k = 1.0 / (SEQ_LEN ** 0.5)
    weight = jax.random.uniform(kw, (PRED_LEN, SEQ_LEN), jnp.float32, -k, k)
    bias = jax.random.uniform(kb, (PRED_LEN,), jnp.float32, -k, k)

    x_enc = jax.random.normal(kx, (B, SEQ_LEN, C), jnp.float32)

    pred = t_linear_forward(x_enc, weight, bias)
    pred = jax.block_until_ready(pred)

    # Reference check in plain JAX (same math as the PyTorch module)
    ref = jnp.einsum("bsc,ps->bpc", x_enc, weight) + bias[None, :, None]
    assert pred.shape == (B, PRED_LEN, C)
    assert jnp.allclose(pred, ref, atol=1e-5, rtol=1e-5)

    print("KERNEL_OK")
</pallas_src>

<mosaic_0001>
module attributes {stable_mosaic.version = 11 : i64} {
  func.func @t_linear_kernel(%arg0: i32, %arg1: memref<8x8xf32, #tpu.memory_space<vmem>>, %arg2: memref<8x12xf32, #tpu.memory_space<vmem>>, %arg3: memref<1x12xf32, #tpu.memory_space<vmem>>, %arg4: memref<8x12xf32, #tpu.memory_space<vmem>>) attributes {dimension_semantics = [#tpu.dimension_semantics<parallel>], iteration_bounds = array<i64: 1>, scalar_prefetch = 0 : i64, scratch_operands = 0 : i64, tpu.core_type = #tpu.core_type<tc>, window_params = [{transform_indices = @transform_0, window_bounds = array<i64: 8, 8>}, {pipeline_mode = #tpu.pipeline_mode<synchronous>, transform_indices = @transform_1, window_bounds = array<i64: 8, 12>}, {pipeline_mode = #tpu.pipeline_mode<synchronous>, transform_indices = @transform_2, window_bounds = array<i64: 1, 12>}, {transform_indices = @transform_3, window_bounds = array<i64: 8, 12>}]} {
    %c0 = arith.constant 0 : index
    %c0_0 = arith.constant 0 : index
    %0 = vector.load %arg1[%c0, %c0_0] : memref<8x8xf32, #tpu.memory_space<vmem>>, vector<8x8xf32>
    %c0_1 = arith.constant 0 : index
    %c0_2 = arith.constant 0 : index
    %1 = vector.load %arg2[%c0_1, %c0_2] : memref<8x12xf32, #tpu.memory_space<vmem>>, vector<8x12xf32>
    %cst = arith.constant dense<0.000000e+00> : vector<8x12xf32>
    %2 = tpu.matmul %0, %1, %cst {dimension_numbers = #tpu.dot_dimension_numbers<[1], [0], [0], [1], [0, 0, 1, 1], [], []>} : vector<8x8xf32>, vector<8x12xf32>, vector<8x12xf32> -> vector<8x12xf32>
    %c0_3 = arith.constant 0 : index
    %c0_4 = arith.constant 0 : index
    %3 = vector.load %arg3[%c0_3, %c0_4] : memref<1x12xf32, #tpu.memory_space<vmem>>, vector<1x12xf32>
    %4 = vector.broadcast %3 : vector<1x12xf32> to vector<8x12xf32>
    %5 = arith.addf %2, %4 : vector<8x12xf32>
    %c0_5 = arith.constant 0 : index
    %c0_6 = arith.constant 0 : index
    %6 = vector.load %arg4[%c0_5, %c0_6] : memref<8x12xf32, #tpu.memory_space<vmem>>, vector<8x12xf32>
    tpu.vector_store %arg4[%c0_5, %c0_6], %5 {strides = array<i32>} : memref<8x12xf32, #tpu.memory_space<vmem>>, vector<8x12xf32>,
    return
  }
  func.func @transform_0(%arg0: i32) -> (i32, i32) {
    %c0_i32 = arith.constant 0 : i32
    %c0_i32_0 = arith.constant 0 : i32
    return %arg0, %c0_i32 : i32, i32
  }
  func.func @transform_1(%arg0: i32) -> (i32, i32) {
    %c0_i32 = arith.constant 0 : i32
    %c0_i32_0 = arith.constant 0 : i32
    %c0_i32_1 = arith.constant 0 : i32
    return %c0_i32, %c0_i32_0 : i32, i32
  }
  func.func @transform_2(%arg0: i32) -> (i32, i32) {
    %c0_i32 = arith.constant 0 : i32
    %c0_i32_0 = arith.constant 0 : i32
    %c0_i32_1 = arith.constant 0 : i32
    return %c0_i32, %c0_i32_0 : i32, i32
  }
  func.func @transform_3(%arg0: i32) -> (i32, i32) {
    %c0_i32 = arith.constant 0 : i32
    %c0_i32_0 = arith.constant 0 : i32
    return %arg0, %c0_i32 : i32, i32
  }
}

</mosaic_0001>

<llo_original>
// kernel: tpu_custom_call.1
$region0: #{tpu_custom_call.1}
  #allocation0 [shape = 'u32[]', space=smem, size = 0x4, offset = 0x4, fixed_abs, tag = 'smem constant byte address 0x4 - core index']
  #allocation1 [shape = 'u32[144,128]{1,0:T(1,128)}', space=vmem, size = 0x12000, scoped, tag = 'internal scratch']
  %s0 = inlined_call_operand.hbm [shape: f32[8,8], index: 0, kind: input, shape index: {}]
  %s1 = inlined_call_operand.hbm [shape: f32[8,12], index: 1, kind: input, shape index: {}]
  %s2 = inlined_call_operand.vmem [shape: f32[1,12], index: 2, kind: input, shape index: {}]
  %s3 = inlined_call_operand.hbm [shape: f32[8,12], index: 3, kind: output, shape index: {}]
  %s4 = sld [smem:[#allocation0]]
  $region30: #{tpu_custom_call.1} parent=0
    _
  %s6 = ssub.s32 1, %s4
  %s7 = scalar_select 0, %s6, %s4
  $region1: #{tpu_custom_call.1} parent=0
    #allocation2 [shape = 'u8[4096]{0}', space=vmem, size = 0x1000, scoped, tag = 'input window, operand 0, single buffered']
    #allocation3 [shape = 's32[1]{0}', space=sflag, size = 0x4, scoped, tag = 'scoped memory for tpu_custom_call.1']
    #allocation4 [shape = 's32[1]{0}', space=sflag, size = 0x4, scoped, tag = 'scoped memory for tpu_custom_call.1']
    #allocation5 [shape = 'u8[4096]{0}', space=vmem, size = 0x1000, scoped, tag = 'input window, operand 1, single buffered']
    #allocation6 [shape = 's32[1]{0}', space=sflag, size = 0x4, scoped, tag = 'scoped memory for tpu_custom_call.1']
    #allocation7 [shape = 'u8[4096]{0}', space=vmem, size = 0x1000, scoped, tag = 'output window, operand 0, single buffered']
    %8 = vsyncpa [#allocation3], 0
    %9 = vsyncpa [#allocation6], 0
    %10 = vsyncpa [#allocation4], 0
    // Predicated region
    $region2: #{tpu_custom_call.1} parent=1 // pred_check
      _
    $region3: #{tpu_custom_call.1} parent=1 // pred_check_branch
      %12 = sbr.rel (0) target = $region5
    $region4: #{tpu_custom_call.1} parent=1 // pred_region
      %s14 = ssub.s32 128, 128
      %15 = vsyncadd [#allocation3], %s14
      %s17 = sshll.u32 [#allocation2], 4
      %s18 = int_to_ptr.vmem [resolvable:$true] %s17
      %20 = dma.hbm_to_vmem [thread:$0]  %s0, 128, %s18, [#allocation3]
    $region5: #{tpu_custom_call.1} parent=1 // pred_fallthru
      _
    // Predicated region
    $region6: #{tpu_custom_call.1} parent=1 // pred_check
      _
    $region7: #{tpu_custom_call.1} parent=1 // pred_check_branch
      %22 = sbr.rel (0) target = $region9
    $region8: #{tpu_custom_call.1} parent=1 // pred_region
      %s24 = ssub.s32 128, 128
      %25 = vsyncadd [#allocation6], %s24
      %s27 = sshll.u32 [#allocation5], 4
      %s28 = int_to_ptr.vmem [resolvable:$true] %s27
      %30 = dma.hbm_to_vmem [thread:$0]  %s1, 128, %s28, [#allocation6]
    $region9: #{tpu_custom_call.1} parent=1 // pred_fallthru
      _
    // Predicated region
    $region10: #{tpu_custom_call.1} parent=1 // pred_check
      _
    $region11: #{tpu_custom_call.1} parent=1 // pred_check_branch
      %32 = sbr.rel (0) target = $region13
    $region12: #{tpu_custom_call.1} parent=1 // pred_region
      _
    $region13: #{tpu_custom_call.1} parent=1 // pred_fallthru
      _
    // Predicated region
    $region14: #{tpu_custom_call.1} parent=1 // pred_check
      _
    $region15: #{tpu_custom_call.1} parent=1 // pred_check_branch
      %34 = sbr.rel (0) target = $region17
    $region16: #{tpu_custom_call.1} parent=1 // pred_region
      %35 = dma.done [#allocation3], 128
    $region17: #{tpu_custom_call.1} parent=1 // pred_fallthru
      _
    // Predicated region
    $region18: #{tpu_custom_call.1} parent=1 // pred_check
      _
    $region19: #{tpu_custom_call.1} parent=1 // pred_check_branch
      %37 = sbr.rel (0) target = $region21
    $region20: #{tpu_custom_call.1} parent=1 // pred_region
      %38 = dma.done [#allocation6], 128
    $region21: #{tpu_custom_call.1} parent=1 // pred_fallthru
      _
    %v39 = vld [vmem:[#allocation2] sm:$0xff]
    %v40 = vld [vmem:[#allocation5] sm:$0xff]
    %v41 = vld [vmem:[%s2] sm:$0x1]
    %v43 = vlaneseq
    %v44 = vshrl.u32 %v43, 7
    %v45 = vsub.s32 0, %v44
    %v46 = vrot.slane %v41, %v45
    %vm48 = vcmask 64512
    %v50 = vsel %vm48, %v39, 0
    %52 = vmatprep.subr.mxu0 0.0
    %53 = vmatpush1.msra.mxu0 0.0
    %54 = vmatprep.subr.mxu0 0.0
    %55 = vmatpush1.msra.mxu0 0.0
    %56 = vmatprep.subr.mxu0 0.0
    %57 = vmatpush1.msra.mxu0 0.0
    %58 = vmatprep.subr.mxu0 0.0
    %59 = vmatpush1.msra.mxu0 0.0
    %60 = vmatprep.subr.mxu0 0.0
    %61 = vmatpush1.msra.mxu0 0.0
    %62 = vmatprep.subr.mxu0 0.0
    %63 = vmatpush1.msra.mxu0 0.0
    %64 = vmatprep.subr.mxu0 0.0
    %65 = vmatpush1.msra.mxu0 0.0
    %66 = vmatprep.subr.mxu0 0.0
    %67 = vmatpush1.msra.mxu0 0.0
    %68 = vmatprep.subr.mxu0 0.0
    %69 = vmatpush1.msra.mxu0 0.0
    %70 = vmatprep.subr.mxu0 0.0
    %71 = vmatpush1.msra.mxu0 0.0
    %72 = vmatprep.subr.mxu0 0.0
    %73 = vmatpush1.msra.mxu0 0.0
    %74 = vmatprep.subr.mxu0 0.0
    %75 = vmatpush1.msra.mxu0 0.0
    %76 = vmatprep.subr.mxu0 0.0
    %77 = vmatpush1.msra.mxu0 0.0
    %78 = vmatprep.subr.mxu0 0.0
    %79 = vmatpush1.msra.mxu0 0.0
    %80 = vmatprep.subr.mxu0 0.0
    %81 = vmatpush1.msra.mxu0 0.0
    %82 = vmatprep.subr.mxu0 0.0
    %83 = vmatpush1.msra.mxu0 %v40
    %84 = vmatprep.subr.mxu0 0.0
    %85 = vmatpush2.msra.mxu0 0.0
    %86 = vmatprep.subr.mxu0 0.0
    %87 = vmatpush2.msra.mxu0 0.0
    %88 = vmatprep.subr.mxu0 0.0
    %89 = vmatpush2.msra.mxu0 0.0
    %90 = vmatprep.subr.mxu0 0.0
    %91 = vmatpush2.msra.mxu0 0.0
    %92 = vmatprep.subr.mxu0 0.0
    %93 = vmatpush2.msra.mxu0 0.0
    %94 = vmatprep.subr.mxu0 0.0
    %95 = vmatpush2.msra.mxu0 0.0
    %96 = vmatprep.subr.mxu0 0.0
    %97 = vmatpush2.msra.mxu0 0.0
    %98 = vmatprep.subr.mxu0 0.0
    %99 = vmatpush2.msra.mxu0 0.0
    %100 = vmatprep.subr.mxu0 0.0
    %101 = vmatpush2.msra.mxu0 0.0
    %102 = vmatprep.subr.mxu0 0.0
    %103 = vmatpush2.msra.mxu0 0.0
    %104 = vmatprep.subr.mxu0 0.0
    %105 = vmatpush2.msra.mxu0 0.0
    %106 = vmatprep.subr.mxu0 0.0
    %107 = vmatpush2.msra.mxu0 0.0
    %108 = vmatprep.subr.mxu0 0.0
    %109 = vmatpush2.msra.mxu0 0.0
    %110 = vmatprep.subr.mxu0 0.0
    %111 = vmatpush2.msra.mxu0 0.0
    %112 = vmatprep.subr.mxu0 0.0
    %113 = vmatpush2.msra.mxu0 0.0
    %114 = vmatprep.subr.mxu0 0.0
    %115 = vmatpush2.msra.mxu0 0.0
    %116 = vmatprep.mubr.f32.mxu0 0.0
    %117 = vmatmul.mubr.f32.gmra.mxu0 %v50
    %v118 = vpop.f32.mrf.mxu0
    %v119 = vadd.f32 %v46, %v118
    %v120 = vpop.f32.mrf.mxu0
    %121 = vdwg.mxu0
    %vm122 = vcmask 97280
    %123 = vst.msk [vmem:[#allocation7] sm:$0xff] %vm122, %v119
    // Predicated region
    $region22: #{tpu_custom_call.1} parent=1 // pred_check
      _
    $region23: #{tpu_custom_call.1} parent=1 // pred_check_branch
      %125 = sbr.rel (0) target = $region25
    $region24: #{tpu_custom_call.1} parent=1 // pred_region
      %s127 = ssub.s32 128, 128
      %128 = vsyncadd [#allocation4], %s127
      %s130 = sshll.u32 [#allocation7], 4
      %s131 = int_to_ptr.vmem [resolvable:$true] %s130
      %133 = dma.vmem_to_hbm [thread:$0]  %s131, 128, %s3, [#allocation4]
    $region25: #{tpu_custom_call.1} parent=1 // pred_fallthru
      _
    // Predicated region
    $region26: #{tpu_custom_call.1} parent=1 // pred_check
      _
    $region27: #{tpu_custom_call.1} parent=1 // pred_check_branch
      %135 = sbr.rel (0) target = $region29
    $region28: #{tpu_custom_call.1} parent=1 // pred_region
      %136 = dma.done [#allocation4], 128
    $region29: #{tpu_custom_call.1} parent=1 // pred_fallthru
      _
    %137 = vsyncpa [#allocation3], 1
    %138 = vsyncpa [#allocation6], 1
    %139 = vsyncpa [#allocation4], 1

</llo_original>
